<compile_context>
chip_gen: v5e
topology: v5e:2x2
jax: 0.10.0
libtpu: 0.0.40
codegen_flags: <defaults>
</compile_context>

<pallas_src>
import jax
import jax.numpy as jnp
from jax.experimental import pallas as pl
from jax.experimental.pallas import tpu as pltpu


def se_block_kernel(x_ref, w1e_ref, b1_ref, w2t_ref, b2_ref, exp_ref, o_ref):
    # x block: (TB, C*N), native dtype; weights/biases are full (untiled) blocks.
    x = x_ref[...]                                                  # (TB, C*N)

    # --- squeeze + fc1 fused (1/N folded into w1e): (TB, C*N) @ (C*N, H) ---
    h = jnp.dot(x, w1e_ref[...], preferred_element_type=jnp.float32) + b1_ref[...]
    h = jnp.maximum(h, 0.0)                                         # relu

    # --- fc2 + sigmoid: (TB, H) @ (H, C) ---
    s = jnp.dot(h, w2t_ref[...], preferred_element_type=jnp.float32) + b2_ref[...]
    s = jax.nn.sigmoid(s)                                           # (TB, C)

    # --- expand per-channel scales back to the flat layout: (TB, C) @ (C, C*N) ---
    s_flat = jnp.dot(s, exp_ref[...], preferred_element_type=jnp.float32)

    # --- rescale in the input dtype (no full-block f32 upcast) ---
    o_ref[...] = (x * s_flat.astype(x.dtype)).astype(o_ref.dtype)


def _choose_batch_tile(B, row_bytes, target_bytes=2 * 1024 * 1024):
    """Largest batch tile keeping one block <= ~2 MiB (double-buffered in+out
    stays far inside the scoped-VMEM default on all generations, including
    v7x's smaller 64 MiB physical VMEM)."""
    if B * row_bytes <= target_bytes:
        return B                       # whole problem in one grid step
    tb = max(8, (target_bytes // max(row_bytes, 1)) // 8 * 8)
    while tb > 8 and B % tb:
        tb -= 8
    # TODO(synk): ragged final-tile handling (pad B) instead of falling back.
    return tb if B % tb == 0 else B


def se_block(x, w1, b1, w2, b2):
    """x: (B, C, N); w1: (H, C); b1: (H,); w2: (C, H); b2: (C,)."""
    B, C, N = x.shape
    H = w1.shape[0]
    CN = C * N

    # Host-side parameter prep (tiny, done once / fused by XLA):
    #   W1_eff[c*N + n, h] = w1[h, c] / N     (avg-pool + fc1 in one matmul)
    #   E[c, c*N + n]      = 1                (channel scale -> flat layout)
    w1t = jnp.asarray(w1, jnp.float32).T                           # (C, H)
    w1e = jnp.repeat(w1t, N, axis=0) * (1.0 / N)                   # (C*N, H)
    w2t = jnp.asarray(w2, jnp.float32).T                           # (H, C)
    b1r = jnp.asarray(b1, jnp.float32).reshape(1, H)
    b2r = jnp.asarray(b2, jnp.float32).reshape(1, C)
    expand = jnp.repeat(jnp.eye(C, dtype=jnp.float32), N, axis=1)  # (C, C*N)

    # Lane-dense view of x: contiguous reshape -> no data movement.
    x_flat = x.reshape(B, CN)

    tb = _choose_batch_tile(B, CN * x.dtype.itemsize)
    grid = (B // tb,)

    out_flat = pl.pallas_call(
        se_block_kernel,
        out_shape=jax.ShapeDtypeStruct((B, CN), x.dtype),
        grid=grid,
        in_specs=[
            pl.BlockSpec((tb, CN), lambda b: (b, 0)),   # x, TB batch rows per step
            pl.BlockSpec((CN, H), lambda b: (0, 0)),    # fused pool + fc1 weight
            pl.BlockSpec((1, H), lambda b: (0, 0)),     # fc1 bias
            pl.BlockSpec((H, C), lambda b: (0, 0)),     # fc2 weight^T
            pl.BlockSpec((1, C), lambda b: (0, 0)),     # fc2 bias
            pl.BlockSpec((C, CN), lambda b: (0, 0)),    # channel -> flat expansion
        ],
        out_specs=pl.BlockSpec((tb, CN), lambda b: (b, 0)),
        compiler_params=pltpu.CompilerParams(
            dimension_semantics=("parallel",)),
    )(x_flat, w1e, b1r, w2t, b2r, expand)

    return out_flat.reshape(B, C, N)


def se_block_ref(x, w1, b1, w2, b2):
    """Pure-JAX reference mirroring the PyTorch forward."""
    pooled = jnp.mean(x, axis=-1)                                  # gap + squeeze -> (B, C)
    h = jax.nn.relu(pooled @ w1.T + b1)                            # fc1 + relu
    s = jax.nn.sigmoid(h @ w2.T + b2)                              # fc2 + sigmoid
    return x * s[:, :, None]


if __name__ == "__main__":
    # Shapes implied by the module: adj is (N, N); x is (B, input_dim, N).
    B = 2
    C = 32                 # input_dim
    N = 16                 # adj.shape[-1]
    reduction_ratio = 8
    H = C // reduction_ratio

    key = jax.random.PRNGKey(0)
    kx, k1, k2, k3, k4 = jax.random.split(key, 5)

    x = jax.random.normal(kx, (B, C, N), dtype=jnp.float32)
    # Deterministic synthetic parameter init (shapes match nn.Linear).
    w1 = jax.random.normal(k1, (H, C), dtype=jnp.float32) * 0.1   # fc1.weight
    b1 = jax.random.normal(k2, (H,), dtype=jnp.float32) * 0.1     # fc1.bias
    w2 = jax.random.normal(k3, (C, H), dtype=jnp.float32) * 0.1   # fc2.weight
    b2 = jax.random.normal(k4, (C,), dtype=jnp.float32) * 0.1     # fc2.bias

    out = se_block(x, w1, b1, w2, b2)
    out = jax.block_until_ready(out)

    ref = se_block_ref(x, w1, b1, w2, b2)
    assert out.shape == (B, C, N)
    assert jnp.allclose(out, ref, atol=1e-5, rtol=1e-5), "mismatch vs reference"

    print("KERNEL_OK")
</pallas_src>

<mosaic_0001>
module attributes {stable_mosaic.version = 11 : i64} {
  func.func @se_block_kernel(%arg0: i32, %arg1: memref<2x512xf32, #tpu.memory_space<vmem>>, %arg2: memref<512x4xf32, #tpu.memory_space<vmem>>, %arg3: memref<1x4xf32, #tpu.memory_space<vmem>>, %arg4: memref<4x32xf32, #tpu.memory_space<vmem>>, %arg5: memref<1x32xf32, #tpu.memory_space<vmem>>, %arg6: memref<32x512xf32, #tpu.memory_space<vmem>>, %arg7: memref<2x512xf32, #tpu.memory_space<vmem>>) attributes {dimension_semantics = [#tpu.dimension_semantics<parallel>], iteration_bounds = array<i64: 1>, scalar_prefetch = 0 : i64, scratch_operands = 0 : i64, tpu.core_type = #tpu.core_type<tc>, window_params = [{transform_indices = @transform_0, window_bounds = array<i64: 2, 512>}, {pipeline_mode = #tpu.pipeline_mode<synchronous>, transform_indices = @transform_1, window_bounds = array<i64: 512, 4>}, {pipeline_mode = #tpu.pipeline_mode<synchronous>, transform_indices = @transform_2, window_bounds = array<i64: 1, 4>}, {pipeline_mode = #tpu.pipeline_mode<synchronous>, transform_indices = @transform_3, window_bounds = array<i64: 4, 32>}, {pipeline_mode = #tpu.pipeline_mode<synchronous>, transform_indices = @transform_4, window_bounds = array<i64: 1, 32>}, {pipeline_mode = #tpu.pipeline_mode<synchronous>, transform_indices = @transform_5, window_bounds = array<i64: 32, 512>}, {transform_indices = @transform_6, window_bounds = array<i64: 2, 512>}]} {
    %c0 = arith.constant 0 : index
    %c0_0 = arith.constant 0 : index
    %0 = vector.load %arg1[%c0, %c0_0] : memref<2x512xf32, #tpu.memory_space<vmem>>, vector<2x512xf32>
    %c0_1 = arith.constant 0 : index
    %c0_2 = arith.constant 0 : index
    %1 = vector.load %arg2[%c0_1, %c0_2] : memref<512x4xf32, #tpu.memory_space<vmem>>, vector<512x4xf32>
    %cst = arith.constant dense<0.000000e+00> : vector<2x4xf32>
    %2 = tpu.matmul %0, %1, %cst {dimension_numbers = #tpu.dot_dimension_numbers<[1], [0], [0], [1], [0, 0, 1, 1], [], []>} : vector<2x512xf32>, vector<512x4xf32>, vector<2x4xf32> -> vector<2x4xf32>
    %c0_3 = arith.constant 0 : index
    %c0_4 = arith.constant 0 : index
    %3 = vector.load %arg3[%c0_3, %c0_4] : memref<1x4xf32, #tpu.memory_space<vmem>>, vector<1x4xf32>
    %4 = vector.broadcast %3 : vector<1x4xf32> to vector<2x4xf32>
    %5 = arith.addf %2, %4 : vector<2x4xf32>
    %cst_5 = arith.constant 0.000000e+00 : f32
    %6 = vector.broadcast %cst_5 : f32 to vector<2x4xf32>
    %7 = arith.maximumf %5, %6 : vector<2x4xf32>
    %c0_6 = arith.constant 0 : index
    %c0_7 = arith.constant 0 : index
    %8 = vector.load %arg4[%c0_6, %c0_7] : memref<4x32xf32, #tpu.memory_space<vmem>>, vector<4x32xf32>
    %cst_8 = arith.constant dense<0.000000e+00> : vector<2x32xf32>
    %9 = tpu.matmul %7, %8, %cst_8 {dimension_numbers = #tpu.dot_dimension_numbers<[1], [0], [0], [1], [0, 0, 1, 1], [], []>} : vector<2x4xf32>, vector<4x32xf32>, vector<2x32xf32> -> vector<2x32xf32>
    %c0_9 = arith.constant 0 : index
    %c0_10 = arith.constant 0 : index
    %10 = vector.load %arg5[%c0_9, %c0_10] : memref<1x32xf32, #tpu.memory_space<vmem>>, vector<1x32xf32>
    %11 = vector.broadcast %10 : vector<1x32xf32> to vector<2x32xf32>
    %12 = arith.addf %9, %11 : vector<2x32xf32>
    %13 = arith.negf %12 : vector<2x32xf32>
    %14 = math.exp %13 : vector<2x32xf32>
    %cst_11 = arith.constant 1.000000e+00 : f32
    %15 = vector.broadcast %cst_11 : f32 to vector<2x32xf32>
    %16 = arith.addf %15, %14 : vector<2x32xf32>
    %17 = arith.divf %15, %16 : vector<2x32xf32>
    %c0_12 = arith.constant 0 : index
    %c0_13 = arith.constant 0 : index
    %18 = vector.load %arg6[%c0_12, %c0_13] : memref<32x512xf32, #tpu.memory_space<vmem>>, vector<32x512xf32>
    %cst_14 = arith.constant dense<0.000000e+00> : vector<2x512xf32>
    %19 = tpu.matmul %17, %18, %cst_14 {dimension_numbers = #tpu.dot_dimension_numbers<[1], [0], [0], [1], [0, 0, 1, 1], [], []>} : vector<2x32xf32>, vector<32x512xf32>, vector<2x512xf32> -> vector<2x512xf32>
    %20 = arith.mulf %0, %19 : vector<2x512xf32>
    %c0_15 = arith.constant 0 : index
    %c0_16 = arith.constant 0 : index
    %21 = vector.load %arg7[%c0_15, %c0_16] : memref<2x512xf32, #tpu.memory_space<vmem>>, vector<2x512xf32>
    tpu.vector_store %arg7[%c0_15, %c0_16], %20 {strides = array<i32>} : memref<2x512xf32, #tpu.memory_space<vmem>>, vector<2x512xf32>,
    return
  }
  func.func @transform_0(%arg0: i32) -> (i32, i32) {
    %c0_i32 = arith.constant 0 : i32
    %c0_i32_0 = arith.constant 0 : i32
    return %arg0, %c0_i32 : i32, i32
  }
  func.func @transform_1(%arg0: i32) -> (i32, i32) {
    %c0_i32 = arith.constant 0 : i32
    %c0_i32_0 = arith.constant 0 : i32
    %c0_i32_1 = arith.constant 0 : i32
    return %c0_i32, %c0_i32_0 : i32, i32
  }
  func.func @transform_2(%arg0: i32) -> (i32, i32) {
    %c0_i32 = arith.constant 0 : i32
    %c0_i32_0 = arith.constant 0 : i32
    %c0_i32_1 = arith.constant 0 : i32
    return %c0_i32, %c0_i32_0 : i32, i32
  }
  func.func @transform_3(%arg0: i32) -> (i32, i32) {
    %c0_i32 = arith.constant 0 : i32
    %c0_i32_0 = arith.constant 0 : i32
    %c0_i32_1 = arith.constant 0 : i32
    return %c0_i32, %c0_i32_0 : i32, i32
  }
  func.func @transform_4(%arg0: i32) -> (i32, i32) {
    %c0_i32 = arith.constant 0 : i32
    %c0_i32_0 = arith.constant 0 : i32
    %c0_i32_1 = arith.constant 0 : i32
    return %c0_i32, %c0_i32_0 : i32, i32
  }
  func.func @transform_5(%arg0: i32) -> (i32, i32) {
    %c0_i32 = arith.constant 0 : i32
    %c0_i32_0 = arith.constant 0 : i32
    %c0_i32_1 = arith.constant 0 : i32
    return %c0_i32, %c0_i32_0 : i32, i32
  }
  func.func @transform_6(%arg0: i32) -> (i32, i32) {
    %c0_i32 = arith.constant 0 : i32
    %c0_i32_0 = arith.constant 0 : i32
    return %arg0, %c0_i32 : i32, i32
  }
}

</mosaic_0001>

<llo_original>
// kernel: tpu_custom_call.1
$region0: #{tpu_custom_call.1}
  #allocation0 [shape = 'u32[]', space=smem, size = 0x4, offset = 0x4, fixed_abs, tag = 'smem constant byte address 0x4 - core index']
  #allocation1 [shape = 'u32[72,128]{1,0:T(1,128)}', space=vmem, size = 0x9000, scoped, tag = 'internal scratch']
  %s0 = inlined_call_operand.vmem [shape: f32[2,512], index: 0, kind: input, shape index: {}]
  %s1 = inlined_call_operand.vmem [shape: f32[512,4], index: 1, kind: input, shape index: {}]
  %s2 = inlined_call_operand.vmem [shape: f32[1,4], index: 2, kind: input, shape index: {}]
  %s3 = inlined_call_operand.vmem [shape: f32[4,32], index: 3, kind: input, shape index: {}]
  %s4 = inlined_call_operand.vmem [shape: f32[1,32], index: 4, kind: input, shape index: {}]
  %s5 = inlined_call_operand.vmem [shape: f32[32,512], index: 5, kind: input, shape index: {}]
  %s6 = inlined_call_operand.hbm [shape: f32[2,512], index: 6, kind: output, shape index: {}]
  %s7 = sld [smem:[#allocation0]]
  $region34: #{tpu_custom_call.1} parent=0
    _
  %s9 = ssub.s32 1, %s7
  %s10 = scalar_select 0, %s9, %s7
  $region1: #{tpu_custom_call.1} parent=0
    #allocation2 [shape = 'u8[4096]{0}', space=vmem, size = 0x1000, scoped, tag = 'output window, operand 0, single buffered']
    #allocation3 [shape = 's32[1]{0}', space=sflag, size = 0x4, scoped, tag = 'scoped memory for tpu_custom_call.1']
    %11 = vsyncpa [#allocation3], 0
    // Predicated region
    $region2: #{tpu_custom_call.1} parent=1 // pred_check
      _
    $region3: #{tpu_custom_call.1} parent=1 // pred_check_branch
      %13 = sbr.rel (0) target = $region5
    $region4: #{tpu_custom_call.1} parent=1 // pred_region
      _
    $region5: #{tpu_custom_call.1} parent=1 // pred_fallthru
      _
    // Predicated region
    $region6: #{tpu_custom_call.1} parent=1 // pred_check
      _
    $region7: #{tpu_custom_call.1} parent=1 // pred_check_branch
      %15 = sbr.rel (0) target = $region9
    $region8: #{tpu_custom_call.1} parent=1 // pred_region
      _
    $region9: #{tpu_custom_call.1} parent=1 // pred_fallthru
      _
    // Predicated region
    $region10: #{tpu_custom_call.1} parent=1 // pred_check
      _
    $region11: #{tpu_custom_call.1} parent=1 // pred_check_branch
      %17 = sbr.rel (0) target = $region13
    $region12: #{tpu_custom_call.1} parent=1 // pred_region
      _
    $region13: #{tpu_custom_call.1} parent=1 // pred_fallthru
      _
    // Predicated region
    $region14: #{tpu_custom_call.1} parent=1 // pred_check
      _
    $region15: #{tpu_custom_call.1} parent=1 // pred_check_branch
      %19 = sbr.rel (0) target = $region17
    $region16: #{tpu_custom_call.1} parent=1 // pred_region
      _
    $region17: #{tpu_custom_call.1} parent=1 // pred_fallthru
      _
    // Predicated region
    $region18: #{tpu_custom_call.1} parent=1 // pred_check
      _
    $region19: #{tpu_custom_call.1} parent=1 // pred_check_branch
      %21 = sbr.rel (0) target = $region21
    $region20: #{tpu_custom_call.1} parent=1 // pred_region
      _
    $region21: #{tpu_custom_call.1} parent=1 // pred_fallthru
      _
    // Predicated region
    $region22: #{tpu_custom_call.1} parent=1 // pred_check
      _
    $region23: #{tpu_custom_call.1} parent=1 // pred_check_branch
      %23 = sbr.rel (0) target = $region25
    $region24: #{tpu_custom_call.1} parent=1 // pred_region
      _
    $region25: #{tpu_custom_call.1} parent=1 // pred_fallthru
      _
    %v24 = vld [vmem:[%s0] sm:$0xff]
    %v25 = vld [vmem:[%s1] sm:$0xff]
    %v26 = vld [vmem:[%s1 + $0x8] sm:$0xff]
    %v27 = vld [vmem:[%s1 + $0x10] sm:$0xff]
    %v28 = vld [vmem:[%s1 + $0x18] sm:$0xff]
    %v29 = vld [vmem:[%s1 + $0x20] sm:$0xff]
    %v30 = vld [vmem:[%s1 + $0x28] sm:$0xff]
    %v31 = vld [vmem:[%s1 + $0x30] sm:$0xff]
    %v32 = vld [vmem:[%s1 + $0x38] sm:$0xff]
    %v33 = vld [vmem:[%s1 + $0x40] sm:$0xff]
    %v34 = vld [vmem:[%s1 + $0x48] sm:$0xff]
    %v35 = vld [vmem:[%s1 + $0x50] sm:$0xff]
    %v36 = vld [vmem:[%s1 + $0x58] sm:$0xff]
    %v37 = vld [vmem:[%s1 + $0x60] sm:$0xff]
    %v38 = vld [vmem:[%s1 + $0x68] sm:$0xff]
    %v39 = vld [vmem:[%s1 + $0x70] sm:$0xff]
    %v40 = vld [vmem:[%s1 + $0x78] sm:$0xff]
    %v41 = vld [vmem:[%s1 + $0x80] sm:$0xff]
    %v42 = vld [vmem:[%s1 + $0x88] sm:$0xff]
    %v43 = vld [vmem:[%s1 + $0x90] sm:$0xff]
    %v44 = vld [vmem:[%s1 + $0x98] sm:$0xff]
    %v45 = vld [vmem:[%s1 + $0xa0] sm:$0xff]
    %v46 = vld [vmem:[%s1 + $0xa8] sm:$0xff]
    %v47 = vld [vmem:[%s1 + $0xb0] sm:$0xff]
    %v48 = vld [vmem:[%s1 + $0xb8] sm:$0xff]
    %v49 = vld [vmem:[%s1 + $0xc0] sm:$0xff]
    %v50 = vld [vmem:[%s1 + $0xc8] sm:$0xff]
    %v51 = vld [vmem:[%s1 + $0xd0] sm:$0xff]
    %v52 = vld [vmem:[%s1 + $0xd8] sm:$0xff]
    %v53 = vld [vmem:[%s1 + $0xe0] sm:$0xff]
    %v54 = vld [vmem:[%s1 + $0xe8] sm:$0xff]
    %v55 = vld [vmem:[%s1 + $0xf0] sm:$0xff]
    %v56 = vld [vmem:[%s1 + $0xf8] sm:$0xff]
    %v57 = vld [vmem:[%s1 + $0x100] sm:$0xff]
    %v58 = vld [vmem:[%s1 + $0x108] sm:$0xff]
    %v59 = vld [vmem:[%s1 + $0x110] sm:$0xff]
    %v60 = vld [vmem:[%s1 + $0x118] sm:$0xff]
    %v61 = vld [vmem:[%s1 + $0x120] sm:$0xff]
    %v62 = vld [vmem:[%s1 + $0x128] sm:$0xff]
    %v63 = vld [vmem:[%s1 + $0x130] sm:$0xff]
    %v64 = vld [vmem:[%s1 + $0x138] sm:$0xff]
    %v65 = vld [vmem:[%s1 + $0x140] sm:$0xff]
    %v66 = vld [vmem:[%s1 + $0x148] sm:$0xff]
    %v67 = vld [vmem:[%s1 + $0x150] sm:$0xff]
    %v68 = vld [vmem:[%s1 + $0x158] sm:$0xff]
    %v69 = vld [vmem:[%s1 + $0x160] sm:$0xff]
    %v70 = vld [vmem:[%s1 + $0x168] sm:$0xff]
    %v71 = vld [vmem:[%s1 + $0x170] sm:$0xff]
    %v72 = vld [vmem:[%s1 + $0x178] sm:$0xff]
    %v73 = vld [vmem:[%s1 + $0x180] sm:$0xff]
    %v74 = vld [vmem:[%s1 + $0x188] sm:$0xff]
    %v75 = vld [vmem:[%s1 + $0x190] sm:$0xff]
    %v76 = vld [vmem:[%s1 + $0x198] sm:$0xff]
    %v77 = vld [vmem:[%s1 + $0x1a0] sm:$0xff]
    %v78 = vld [vmem:[%s1 + $0x1a8] sm:$0xff]
    %v79 = vld [vmem:[%s1 + $0x1b0] sm:$0xff]
    %v80 = vld [vmem:[%s1 + $0x1b8] sm:$0xff]
    %v81 = vld [vmem:[%s1 + $0x1c0] sm:$0xff]
    %v82 = vld [vmem:[%s1 + $0x1c8] sm:$0xff]
    %v83 = vld [vmem:[%s1 + $0x1d0] sm:$0xff]
    %v84 = vld [vmem:[%s1 + $0x1d8] sm:$0xff]
    %v85 = vld [vmem:[%s1 + $0x1e0] sm:$0xff]
    %v86 = vld [vmem:[%s1 + $0x1e8] sm:$0xff]
    %v87 = vld [vmem:[%s1 + $0x1f0] sm:$0xff]
    %v88 = vld [vmem:[%s1 + $0x1f8] sm:$0xff]
    %v89 = vld [vmem:[%s2] sm:$0x1]
    %v91 = vperm.slane %v89, 0
    %94 = vst [vmem:[#allocation1] ss:$4 sm:$0xff] %v24
    %v95 = vld.sshfl [vmem:[#allocation1] sm:$0xff pattern:$0x73625140]
    %v96 = vld.sshfl [vmem:[#allocation1 + $0x8] sm:$0xff pattern:$0x73625140]
    %v97 = vld.sshfl [vmem:[#allocation1 + $0x10] sm:$0xff pattern:$0x73625140]
    %v98 = vld.sshfl [vmem:[#allocation1 + $0x18] sm:$0xff pattern:$0x73625140]
    %103 = vmatpush.msra.mxu0 %v40
    %104 = vmatpush.msra.mxu0 %v39
    %105 = vmatpush.msra.mxu0 %v38
    %106 = vmatpush.msra.mxu0 %v37
    %107 = vmatpush.msra.mxu0 %v36
    %108 = vmatpush.msra.mxu0 %v35
    %109 = vmatpush.msra.mxu0 %v34
    %110 = vmatpush.msra.mxu0 %v33
    %111 = vmatpush.msra.mxu0 %v32
    %112 = vmatpush.msra.mxu0 %v31
    %113 = vmatpush.msra.mxu0 %v30
    %114 = vmatpush.msra.mxu0 %v29
    %115 = vmatpush.msra.mxu0 %v28
    %116 = vmatpush.msra.mxu0 %v27
    %117 = vmatpush.msra.mxu0 %v26
    %118 = vmatpush.msra.mxu0 %v25
    %119 = vmatmul.f32.gmra.mxu0 %v95
    %v120 = vpop.f32.mrf.mxu0
    %v121 = vadd.f32 %v91, %v120
    %122 = vdwg.mxu0
    %123 = vmatpush.msra.mxu0 %v56
    %124 = vmatpush.msra.mxu0 %v55
    %125 = vmatpush.msra.mxu0 %v54
    %126 = vmatpush.msra.mxu0 %v53
    %127 = vmatpush.msra.mxu0 %v52
    %128 = vmatpush.msra.mxu0 %v51
    %129 = vmatpush.msra.mxu0 %v50
    %130 = vmatpush.msra.mxu0 %v49
    %131 = vmatpush.msra.mxu0 %v48
    %132 = vmatpush.msra.mxu0 %v47
    %133 = vmatpush.msra.mxu0 %v46
    %134 = vmatpush.msra.mxu0 %v45
    %135 = vmatpush.msra.mxu0 %v44
    %136 = vmatpush.msra.mxu0 %v43
    %137 = vmatpush.msra.mxu0 %v42
    %138 = vmatpush.msra.mxu0 %v41
    %139 = vmatmul.f32.gmra.mxu0 %v96
    %v140 = vpop.f32.mrf.mxu0
    %v141 = vadd.f32 %v121, %v140
    %142 = vdwg.mxu0
    %143 = vmatpush.msra.mxu0 %v72
    %144 = vmatpush.msra.mxu0 %v71
    %145 = vmatpush.msra.mxu0 %v70
    %146 = vmatpush.msra.mxu0 %v69
    %147 = vmatpush.msra.mxu0 %v68
    %148 = vmatpush.msra.mxu0 %v67
    %149 = vmatpush.msra.mxu0 %v66
    %150 = vmatpush.msra.mxu0 %v65
    %151 = vmatpush.msra.mxu0 %v64
    %152 = vmatpush.msra.mxu0 %v63
    %153 = vmatpush.msra.mxu0 %v62
    %154 = vmatpush.msra.mxu0 %v61
    %155 = vmatpush.msra.mxu0 %v60
    %156 = vmatpush.msra.mxu0 %v59
    %157 = vmatpush.msra.mxu0 %v58
    %158 = vmatpush.msra.mxu0 %v57
    %159 = vmatmul.f32.gmra.mxu0 %v97
    %v160 = vpop.f32.mrf.mxu0
    %v161 = vadd.f32 %v141, %v160
    %162 = vdwg.mxu0
    %163 = vmatpush.msra.mxu0 %v88
    %164 = vmatpush.msra.mxu0 %v87
    %165 = vmatpush.msra.mxu0 %v86
    %166 = vmatpush.msra.mxu0 %v85
    %167 = vmatpush.msra.mxu0 %v84
    %168 = vmatpush.msra.mxu0 %v83
    %169 = vmatpush.msra.mxu0 %v82
    %170 = vmatpush.msra.mxu0 %v81
    %171 = vmatpush.msra.mxu0 %v80
    %172 = vmatpush.msra.mxu0 %v79
    %173 = vmatpush.msra.mxu0 %v78
    %174 = vmatpush.msra.mxu0 %v77
    %175 = vmatpush.msra.mxu0 %v76
    %176 = vmatpush.msra.mxu0 %v75
    %177 = vmatpush.msra.mxu0 %v74
    %178 = vmatpush.msra.mxu0 %v73
    %179 = vmatmul.f32.gmra.mxu0 %v98
    %v180 = vpop.f32.mrf.mxu0
    %v181 = vadd.f32 %v161, %v180
    %182 = vdwg.mxu0
    %v183 = vmax.f32 %v181, 0.0
    %v184 = vld [vmem:[%s3] sm:$0xf]
    %v185 = vld [vmem:[%s4] sm:$0x1]
    %v187 = vperm.slane %v185, 0
    %vm189 = vcmask 31744
    %v191 = vsel %vm189, %v183, 0
    %vm193 = vcmask 1043456
    %v195 = vsel %vm193, %v184, 0
    %197 = vmatpush.msra.mxu0 0.0
    %198 = vmatpush.msra.mxu0 0.0
    %199 = vmatpush.msra.mxu0 0.0
    %200 = vmatpush.msra.mxu0 0.0
    %201 = vmatpush.msra.mxu0 0.0
    %202 = vmatpush.msra.mxu0 0.0
    %203 = vmatpush.msra.mxu0 0.0
    %204 = vmatpush.msra.mxu0 0.0
    %205 = vmatpush.msra.mxu0 0.0
    %206 = vmatpush.msra.mxu0 0.0
    %207 = vmatpush.msra.mxu0 0.0
    %208 = vmatpush.msra.mxu0 0.0
    %209 = vmatpush.msra.mxu0 0.0
    %210 = vmatpush.msra.mxu0 0.0
    %211 = vmatpush.msra.mxu0 0.0
    %212 = vmatpush.msra.mxu0 %v195
    %213 = vmatmul.f32.gmra.mxu0 %v191
    %v214 = vpop.f32.mrf.mxu0
    %v215 = vadd.f32 %v187, %v214
    %216 = vdwg.mxu0
    %v217 = vxor.u32 %v215, 2147483648
    %v218 = vmul.f32 %v217, 1.442695
    %v219 = vpow.pop %v218
    %v220 = vadd.f32 %v219, 1.0
    %v221 = vrcp.pop %v220
    %v222 = vmul.f32 %v220, %v221
    %v223 = vsub.f32 1.0, %v222
    %v224 = vmul.f32 %v221, %v223
    %v225 = vadd.f32 %v221, %v224
    %vm226 = vweird.f32 %v220
    %vm227 = vweird.f32 %v221
    %vm228 = vmor %vm226, %vm227
    %v229 = vsel %vm228, %v221, %v225
    %v230 = vand.u32 2147483647, %v220
    %vm231 = vcmp.eq.f32.partialorder %v230, 8.507059e+37
    %v232 = vand.u32 %v220, 2147483648
    %v233 = vor.u32 1.1754944e-38, %v232
    %v234 = vsel %vm231, %v233, %v229
    %v235 = vmul.f32 1.0, %v234
    %v236 = vld [vmem:[%s5] sm:$0xff]
    %v237 = vld [vmem:[%s5 + $0x8] sm:$0xff]
    %v238 = vld [vmem:[%s5 + $0x10] sm:$0xff]
    %v239 = vld [vmem:[%s5 + $0x18] sm:$0xff]
    %v240 = vld [vmem:[%s5 + $0x20] sm:$0xff]
    %v241 = vld [vmem:[%s5 + $0x28] sm:$0xff]
    %v242 = vld [vmem:[%s5 + $0x30] sm:$0xff]
    %v243 = vld [vmem:[%s5 + $0x38] sm:$0xff]
    %v244 = vld [vmem:[%s5 + $0x40] sm:$0xff]
    %v245 = vld [vmem:[%s5 + $0x48] sm:$0xff]
    %v246 = vld [vmem:[%s5 + $0x50] sm:$0xff]
    %v247 = vld [vmem:[%s5 + $0x58] sm:$0xff]
    %v248 = vld [vmem:[%s5 + $0x60] sm:$0xff]
    %v249 = vld [vmem:[%s5 + $0x68] sm:$0xff]
    %v250 = vld [vmem:[%s5 + $0x70] sm:$0xff]
    %v251 = vld [vmem:[%s5 + $0x78] sm:$0xff]
    %vm252 = vcmask 261120
    %v254 = vsel %vm252, %v235, 0
    %256 = vmatpush.msra.mxu0 0.0
    %257 = vmatpush.msra.mxu0 0.0
    %258 = vmatpush.msra.mxu0 0.0
    %259 = vmatpush.msra.mxu0 0.0
    %260 = vmatpush.msra.mxu0 0.0
    %261 = vmatpush.msra.mxu0 0.0
    %262 = vmatpush.msra.mxu0 0.0
    %263 = vmatpush.msra.mxu0 0.0
    %264 = vmatpush.msra.mxu0 0.0
    %265 = vmatpush.msra.mxu0 0.0
    %266 = vmatpush.msra.mxu0 0.0
    %267 = vmatpush.msra.mxu0 0.0
    %268 = vmatpush.msra.mxu0 %v248
    %269 = vmatpush.msra.mxu0 %v244
    %270 = vmatpush.msra.mxu0 %v240
    %271 = vmatpush.msra.mxu0 %v236
    %272 = vmatmul.f32.gmra.mxu0 %v254
    %v273 = vpop.f32.mrf.mxu0
    %v274 = vadd.f32 0.0, %v273
    %275 = vdwg.mxu0
    %276 = vmatpush.msra.mxu0 0.0
    %277 = vmatpush.msra.mxu0 0.0
    %278 = vmatpush.msra.mxu0 0.0
    %279 = vmatpush.msra.mxu0 0.0
    %280 = vmatpush.msra.mxu0 0.0
    %281 = vmatpush.msra.mxu0 0.0
    %282 = vmatpush.msra.mxu0 0.0
    %283 = vmatpush.msra.mxu0 0.0
    %284 = vmatpush.msra.mxu0 0.0
    %285 = vmatpush.msra.mxu0 0.0
    %286 = vmatpush.msra.mxu0 0.0
    %287 = vmatpush.msra.mxu0 0.0
    %288 = vmatpush.msra.mxu0 %v249
    %289 = vmatpush.msra.mxu0 %v245
    %290 = vmatpush.msra.mxu0 %v241
    %291 = vmatpush.msra.mxu0 %v237
    %292 = vmatmul.f32.gmra.mxu0 %v254
    %v293 = vpop.f32.mrf.mxu0
    %v294 = vadd.f32 0.0, %v293
    %295 = vdwg.mxu0
    %296 = vmatpush.msra.mxu0 0.0
    %297 = vmatpush.msra.mxu0 0.0
    %298 = vmatpush.msra.mxu0 0.0
    %299 = vmatpush.msra.mxu0 0.0
    %300 = vmatpush.msra.mxu0 0.0
    %301 = vmatpush.msra.mxu0 0.0
    %302 = vmatpush.msra.mxu0 0.0
    %303 = vmatpush.msra.mxu0 0.0
    %304 = vmatpush.msra.mxu0 0.0
    %305 = vmatpush.msra.mxu0 0.0
    %306 = vmatpush.msra.mxu0 0.0
    %307 = vmatpush.msra.mxu0 0.0
    %308 = vmatpush.msra.mxu0 %v250
    %309 = vmatpush.msra.mxu0 %v246
    %310 = vmatpush.msra.mxu0 %v242
    %311 = vmatpush.msra.mxu0 %v238
    %312 = vmatmul.f32.gmra.mxu0 %v254
    %v313 = vpop.f32.mrf.mxu0
    %v314 = vadd.f32 0.0, %v313
    %315 = vdwg.mxu0
    %316 = vmatpush.msra.mxu0 0.0
    %317 = vmatpush.msra.mxu0 0.0
    %318 = vmatpush.msra.mxu0 0.0
    %319 = vmatpush.msra.mxu0 0.0
    %320 = vmatpush.msra.mxu0 0.0
    %321 = vmatpush.msra.mxu0 0.0
    %322 = vmatpush.msra.mxu0 0.0
    %323 = vmatpush.msra.mxu0 0.0
    %324 = vmatpush.msra.mxu0 0.0
    %325 = vmatpush.msra.mxu0 0.0
    %326 = vmatpush.msra.mxu0 0.0
    %327 = vmatpush.msra.mxu0 0.0
    %328 = vmatpush.msra.mxu0 %v251
    %329 = vmatpush.msra.mxu0 %v247
    %330 = vmatpush.msra.mxu0 %v243
    %331 = vmatpush.msra.mxu0 %v239
    %332 = vmatmul.f32.gmra.mxu0 %v254
    %v333 = vpop.f32.mrf.mxu0
    %v334 = vadd.f32 0.0, %v333
    %335 = vdwg.mxu0
    %v340 = vrot.slane %v294, 6
    %v341 = vrot.slane %v314, 4
    %v342 = vrot.slane %v334, 2
    %vm343 = vcmask 1041408
    %v344 = vsel %vm343, %v274, %v340
    %vm345 = vcmask 1045508
    %v346 = vsel %vm345, %v341, %v342
    %v347 = vsel %vm193, %v344, %v346
    %v349 = vmul.f32 %v24, %v347
    %350 = vst [vmem:[#allocation2] sm:$0xff] %v349
    // Predicated region
    $region26: #{tpu_custom_call.1} parent=1 // pred_check
      _
    $region27: #{tpu_custom_call.1} parent=1 // pred_check_branch
      %352 = sbr.rel (0) target = $region29
    $region28: #{tpu_custom_call.1} parent=1 // pred_region
      %354 = vsyncadd [#allocation3], 0
      %s356 = sshll.u32 [#allocation2], 4
      %s357 = int_to_ptr.vmem [resolvable:$true] %s356
      %s358 = sshll.u32 %s6, 4
      %s359 = int_to_ptr.hbm [resolvable:$true] %s358
      %361 = dma.vmem_to_hbm [thread:$0]  %s357, 128, %s359, [#allocation3]
    $region29: #{tpu_custom_call.1} parent=1 // pred_fallthru
      _
    // Predicated region
    $region30: #{tpu_custom_call.1} parent=1 // pred_check
      _
    $region31: #{tpu_custom_call.1} parent=1 // pred_check_branch
      %363 = sbr.rel (0) target = $region33
    $region32: #{tpu_custom_call.1} parent=1 // pred_region
      %365 = dma.done [#allocation3], 128
    $region33: #{tpu_custom_call.1} parent=1 // pred_fallthru
      _
    %366 = vsyncpa [#allocation3], 1

</llo_original>
